<compile_context>
chip_gen: v5e
topology: v5e:2x2
jax: 0.10.0
libtpu: 0.0.40
codegen_flags: <defaults>
</compile_context>

<pallas_src>
import functools

import jax
import jax.numpy as jnp
from jax import lax
from jax.experimental import pallas as pl
from jax.experimental.pallas import tpu as pltpu


def _round_up(v, m):
    return ((v + m - 1) // m) * m


def mlp_kernel(x_ref, w1_ref, b1_ref, w2_ref, b2_ref, wo_ref, bo_ref, o_ref):
    """relu(fc1) -> relu(fc2) -> fc_output, activations in batch-on-lane layout.

    x_ref : (tile_b, n_in)  natural PyTorch layout (no host-side transpose)
    w1/w2 : PyTorch (out, in) layout; wo_ref is pre-transposed to (h2, n_out)
    b*    : (out, 1) f32, broadcast over the batch lanes
    o_ref : (n_out, tile_b) lane-dense output block
    """
    x = x_ref[...]                                               # (tile_b, n_in)

    # fc1 + ReLU: contract the feature dim of both operands so the MXU consumes
    # x^T in place:  (h1, n_in) . (tile_b, n_in)^T -> (h1, tile_b)
    h = lax.dot_general(w1_ref[...], x, (((1,), (1,)), ((), ())),
                        preferred_element_type=jnp.float32)
    h = jnp.maximum(h + b1_ref[...], 0.0)

    # fc2 + ReLU : (h2, h1) @ (h1, tile_b) -> (h2, tile_b)
    h = jnp.dot(w2_ref[...], h.astype(w2_ref.dtype),
                preferred_element_type=jnp.float32)
    h = jnp.maximum(h + b2_ref[...], 0.0)

    # fc_output (no activation).  wo_ref is (h2, n_out).
    n_out = wo_ref.shape[1]
    if n_out == 1:
        # 1-wide head: VPU multiply + sublane (XLU) reduce instead of a
        # >99%-padded MXU pass.
        out = jnp.sum(wo_ref[...].astype(jnp.float32) * h, axis=0, keepdims=True)
    else:
        out = lax.dot_general(wo_ref[...], h.astype(wo_ref.dtype),
                              (((0,), (0,)), ((), ())),
                              preferred_element_type=jnp.float32)

    o_ref[...] = (out + bo_ref[...]).astype(o_ref.dtype)         # (n_out, tile_b)


def net_forward(x, params, *, tile_b=4096,
                compute_dtype=jnp.float32, out_dtype=jnp.float32):
    """Forward pass of Net.

    x:      (batch, n_inputs) float array (natural PyTorch layout).
    params: [(W1, b1), (W2, b2), (Wo, bo)] with W in PyTorch (out, in) layout
            and b of shape (out,).
    """
    (w1, b1), (w2, b2), (wo, bo) = params
    batch, n_in = x.shape
    h1 = w1.shape[0]
    h2 = w2.shape[0]
    n_out = wo.shape[0]

    # ---- batch tiling -------------------------------------------------------
    # Batch rides the 128-lane axis inside the kernel, so round to 128.
    b128 = _round_up(batch, 128)
    tile = max(128, min(_round_up(tile_b, 128), b128))
    # v7x has two TensorCores: keep >= 2 grid steps whenever the batch allows,
    # so the "parallel" batch axis actually splits across them.
    if b128 >= 256 and b128 <= tile:
        tile = _round_up(b128 // 2, 128)
    b_pad = _round_up(b128, tile)
    n_tiles = b_pad // tile

    # ---- operands (no host-side transpose of x) ----------------------------
    xk = x.astype(compute_dtype)
    if b_pad != batch:
        xk = jnp.pad(xk, ((0, b_pad - batch), (0, 0)))
    w1k = w1.astype(compute_dtype)                  # (h1, n_in)
    w2k = w2.astype(compute_dtype)                  # (h2, h1)
    wok = wo.T.astype(compute_dtype)                # (h2, n_out)
    b1k = b1.reshape(h1, 1).astype(jnp.float32)
    b2k = b2.reshape(h2, 1).astype(jnp.float32)
    bok = bo.reshape(n_out, 1).astype(jnp.float32)
    operands = (xk, w1k, b1k, w2k, b2k, wok, bok)

    # ---- scheduler hint ------------------------------------------------------
    flops = 2 * b_pad * (n_in * h1 + h1 * h2 + h2 * n_out)
    bytes_accessed = sum(int(a.size) * a.dtype.itemsize for a in operands)
    bytes_accessed += n_out * b_pad * jnp.dtype(out_dtype).itemsize
    cost = pl.CostEstimate(flops=flops, transcendentals=0,
                           bytes_accessed=bytes_accessed)

    # ---- VMEM budget: double-buffered lane-padded x tile + output + weights.
    # The (tile, n_in) x tile lane-pads n_in up to 128; that inflation (not the
    # raw bytes) is what bounds the tile size on v7x's 64 MiB VMEM.
    c_item = jnp.dtype(compute_dtype).itemsize
    x_tile_bytes = tile * 128 * c_item
    out_tile_bytes = max(n_out, 8) * tile * jnp.dtype(out_dtype).itemsize
    weight_bytes = (h1 + h2 + h2 + n_out + h1 + h2) * 128 * 4   # all lane-padded, tiny
    vmem_bytes = 2 * (x_tile_bytes + out_tile_bytes) + 2 * weight_bytes + (2 << 20)
    vmem_bytes = int(min(max(vmem_bytes, 8 << 20), 48 << 20))

    def const_spec(shape):
        # Weight / bias blocks: full array, same block every grid step
        # -> stays resident in VMEM across the batch loop (DMA'd once).
        return pl.BlockSpec(shape, lambda i: (0, 0))

    out_t = pl.pallas_call(
        mlp_kernel,
        out_shape=jax.ShapeDtypeStruct((n_out, b_pad), out_dtype),
        grid=(n_tiles,),
        in_specs=[
            pl.BlockSpec((tile, n_in), lambda i: (i, 0)),   # x, natural layout, batch-tiled
            const_spec((h1, n_in)),
            const_spec((h1, 1)),
            const_spec((h2, h1)),
            const_spec((h2, 1)),
            const_spec((h2, n_out)),
            const_spec((n_out, 1)),
        ],
        out_specs=pl.BlockSpec((n_out, tile), lambda i: (0, i)),  # lane-dense on batch
        compiler_params=pltpu.CompilerParams(
            dimension_semantics=("parallel",),
            vmem_limit_bytes=vmem_bytes,
        ),
        cost_estimate=cost,
    )(*operands)

    # Back to the PyTorch (batch, n_out) layout, dropping batch padding.
    return out_t[:, :batch].T


def init_linear(key, fan_in, fan_out):
    """PyTorch-style Linear init; W in (out, in) layout, b of shape (out,)."""
    kw, kb = jax.random.split(key)
    bound = 1.0 / jnp.sqrt(float(fan_in))
    w = jax.random.uniform(kw, (fan_out, fan_in), jnp.float32, -bound, bound)
    b = jax.random.uniform(kb, (fan_out,), jnp.float32, -bound, bound)
    return w, b


if __name__ == "__main__":
    # Net(n_inputs=10, n_outputs=1, 32, 16): two hidden layers + output head.
    n_inputs, n_layer_1, n_layer_2, n_outputs = 10, 32, 16, 1
    batch = 8

    key = jax.random.PRNGKey(0)
    k_x, k1, k2, k3 = jax.random.split(key, 4)

    x = jax.random.normal(k_x, (batch, n_inputs), jnp.float32)
    params = [
        init_linear(k1, n_inputs, n_layer_1),
        init_linear(k2, n_layer_1, n_layer_2),
        init_linear(k3, n_layer_2, n_outputs),
    ]

    fwd = jax.jit(functools.partial(net_forward, tile_b=4096))
    y = fwd(x, params)
    y = jax.block_until_ready(y)

    # Pure-JAX reference (same semantics as the PyTorch forward, W in (out,in)).
    (w1, b1), (w2, b2), (wo, bo) = params
    ref = jnp.maximum(x @ w1.T + b1, 0.0)
    ref = jnp.maximum(ref @ w2.T + b2, 0.0)
    ref = ref @ wo.T + bo

    assert y.shape == (batch, n_outputs)
    assert jnp.allclose(y, ref, atol=1e-5, rtol=1e-5)

    # TODO(synk): training utilities (weighted_mse_loss loop, Adam optimizer,
    # pandas logging, checkpoint I/O, accuracy plotting) are host-side and
    # intentionally not ported to Pallas.
    print("KERNEL_OK")
</pallas_src>

<mosaic_0001>
module attributes {stable_mosaic.version = 11 : i64} {
  func.func @mlp_kernel(%arg0: i32, %arg1: memref<128x10xf32, #tpu.memory_space<vmem>>, %arg2: memref<32x10xf32, #tpu.memory_space<vmem>>, %arg3: memref<32x1xf32, #tpu.memory_space<vmem>>, %arg4: memref<16x32xf32, #tpu.memory_space<vmem>>, %arg5: memref<16x1xf32, #tpu.memory_space<vmem>>, %arg6: memref<16x1xf32, #tpu.memory_space<vmem>>, %arg7: memref<1x1xf32, #tpu.memory_space<vmem>>, %arg8: memref<1x128xf32, #tpu.memory_space<vmem>>) attributes {dimension_semantics = [#tpu.dimension_semantics<parallel>], iteration_bounds = array<i64: 1>, scalar_prefetch = 0 : i64, scratch_operands = 0 : i64, tpu.core_type = #tpu.core_type<tc>, window_params = [{transform_indices = @transform_0, window_bounds = array<i64: 128, 10>}, {pipeline_mode = #tpu.pipeline_mode<synchronous>, transform_indices = @transform_1, window_bounds = array<i64: 32, 10>}, {pipeline_mode = #tpu.pipeline_mode<synchronous>, transform_indices = @transform_2, window_bounds = array<i64: 32, 1>}, {pipeline_mode = #tpu.pipeline_mode<synchronous>, transform_indices = @transform_3, window_bounds = array<i64: 16, 32>}, {pipeline_mode = #tpu.pipeline_mode<synchronous>, transform_indices = @transform_4, window_bounds = array<i64: 16, 1>}, {pipeline_mode = #tpu.pipeline_mode<synchronous>, transform_indices = @transform_5, window_bounds = array<i64: 16, 1>}, {pipeline_mode = #tpu.pipeline_mode<synchronous>, transform_indices = @transform_6, window_bounds = array<i64: 1, 1>}, {transform_indices = @transform_7, window_bounds = array<i64: 1, 128>}]} {
    %c0 = arith.constant 0 : index
    %c0_0 = arith.constant 0 : index
    %0 = vector.load %arg1[%c0, %c0_0] : memref<128x10xf32, #tpu.memory_space<vmem>>, vector<128x10xf32>
    %c0_1 = arith.constant 0 : index
    %c0_2 = arith.constant 0 : index
    %1 = vector.load %arg2[%c0_1, %c0_2] : memref<32x10xf32, #tpu.memory_space<vmem>>, vector<32x10xf32>
    %cst = arith.constant dense<0.000000e+00> : vector<32x128xf32>
    %2 = tpu.matmul %1, %0, %cst {dimension_numbers = #tpu.dot_dimension_numbers<[1], [1], [0], [0], [0, 0, 1, 0], [], []>} : vector<32x10xf32>, vector<128x10xf32>, vector<32x128xf32> -> vector<32x128xf32>
    %c0_3 = arith.constant 0 : index
    %c0_4 = arith.constant 0 : index
    %3 = vector.load %arg3[%c0_3, %c0_4] : memref<32x1xf32, #tpu.memory_space<vmem>>, vector<32x1xf32>
    %4 = vector.broadcast %3 : vector<32x1xf32> to vector<32x128xf32>
    %5 = arith.addf %2, %4 : vector<32x128xf32>
    %cst_5 = arith.constant 0.000000e+00 : f32
    %6 = vector.broadcast %cst_5 : f32 to vector<32x128xf32>
    %7 = arith.maximumf %5, %6 : vector<32x128xf32>
    %c0_6 = arith.constant 0 : index
    %c0_7 = arith.constant 0 : index
    %8 = vector.load %arg4[%c0_6, %c0_7] : memref<16x32xf32, #tpu.memory_space<vmem>>, vector<16x32xf32>
    %cst_8 = arith.constant dense<0.000000e+00> : vector<16x128xf32>
    %9 = tpu.matmul %8, %7, %cst_8 {dimension_numbers = #tpu.dot_dimension_numbers<[1], [0], [0], [1], [0, 0, 1, 1], [], []>} : vector<16x32xf32>, vector<32x128xf32>, vector<16x128xf32> -> vector<16x128xf32>
    %c0_9 = arith.constant 0 : index
    %c0_10 = arith.constant 0 : index
    %10 = vector.load %arg5[%c0_9, %c0_10] : memref<16x1xf32, #tpu.memory_space<vmem>>, vector<16x1xf32>
    %11 = vector.broadcast %10 : vector<16x1xf32> to vector<16x128xf32>
    %12 = arith.addf %9, %11 : vector<16x128xf32>
    %cst_11 = arith.constant 0.000000e+00 : f32
    %13 = vector.broadcast %cst_11 : f32 to vector<16x128xf32>
    %14 = arith.maximumf %12, %13 : vector<16x128xf32>
    %c0_12 = arith.constant 0 : index
    %c0_13 = arith.constant 0 : index
    %15 = vector.load %arg6[%c0_12, %c0_13] : memref<16x1xf32, #tpu.memory_space<vmem>>, vector<16x1xf32>
    %16 = vector.broadcast %15 : vector<16x1xf32> to vector<16x128xf32>
    %17 = arith.mulf %16, %14 : vector<16x128xf32>
    %cst_14 = arith.constant dense<0.000000e+00> : vector<128xf32>
    %18 = vector.multi_reduction <add>, %17, %cst_14 [0] : vector<16x128xf32> to vector<128xf32>
    %19 = vector.shape_cast %18 : vector<128xf32> to vector<1x128xf32>
    %c0_15 = arith.constant 0 : index
    %c0_16 = arith.constant 0 : index
    %20 = vector.load %arg7[%c0_15, %c0_16] : memref<1x1xf32, #tpu.memory_space<vmem>>, vector<1x1xf32>
    %21 = vector.broadcast %20 : vector<1x1xf32> to vector<1x128xf32>
    %22 = arith.addf %19, %21 : vector<1x128xf32>
    %c0_17 = arith.constant 0 : index
    %c0_18 = arith.constant 0 : index
    %23 = vector.load %arg8[%c0_17, %c0_18] : memref<1x128xf32, #tpu.memory_space<vmem>>, vector<1x128xf32>
    tpu.vector_store %arg8[%c0_17, %c0_18], %22 {strides = array<i32>} : memref<1x128xf32, #tpu.memory_space<vmem>>, vector<1x128xf32>,
    return
  }
  func.func @transform_0(%arg0: i32) -> (i32, i32) {
    %c0_i32 = arith.constant 0 : i32
    %c0_i32_0 = arith.constant 0 : i32
    return %arg0, %c0_i32 : i32, i32
  }
  func.func @transform_1(%arg0: i32) -> (i32, i32) {
    %c0_i32 = arith.constant 0 : i32
    %c0_i32_0 = arith.constant 0 : i32
    %c0_i32_1 = arith.constant 0 : i32
    return %c0_i32, %c0_i32_0 : i32, i32
  }
  func.func @transform_2(%arg0: i32) -> (i32, i32) {
    %c0_i32 = arith.constant 0 : i32
    %c0_i32_0 = arith.constant 0 : i32
    %c0_i32_1 = arith.constant 0 : i32
    return %c0_i32, %c0_i32_0 : i32, i32
  }
  func.func @transform_3(%arg0: i32) -> (i32, i32) {
    %c0_i32 = arith.constant 0 : i32
    %c0_i32_0 = arith.constant 0 : i32
    %c0_i32_1 = arith.constant 0 : i32
    return %c0_i32, %c0_i32_0 : i32, i32
  }
  func.func @transform_4(%arg0: i32) -> (i32, i32) {
    %c0_i32 = arith.constant 0 : i32
    %c0_i32_0 = arith.constant 0 : i32
    %c0_i32_1 = arith.constant 0 : i32
    return %c0_i32, %c0_i32_0 : i32, i32
  }
  func.func @transform_5(%arg0: i32) -> (i32, i32) {
    %c0_i32 = arith.constant 0 : i32
    %c0_i32_0 = arith.constant 0 : i32
    %c0_i32_1 = arith.constant 0 : i32
    return %c0_i32, %c0_i32_0 : i32, i32
  }
  func.func @transform_6(%arg0: i32) -> (i32, i32) {
    %c0_i32 = arith.constant 0 : i32
    %c0_i32_0 = arith.constant 0 : i32
    %c0_i32_1 = arith.constant 0 : i32
    return %c0_i32, %c0_i32_0 : i32, i32
  }
  func.func @transform_7(%arg0: i32) -> (i32, i32) {
    %c0_i32 = arith.constant 0 : i32
    %c0_i32_0 = arith.constant 0 : i32
    return %c0_i32, %arg0 : i32, i32
  }
}

</mosaic_0001>

<llo_original>
// kernel: net_forward.1
$region0: #{net_forward.1}
  #allocation0 [shape = 'u32[]', space=smem, size = 0x4, offset = 0x4, fixed_abs, tag = 'smem constant byte address 0x4 - core index']
  #allocation1 [shape = 'u32[72,128]{1,0:T(1,128)}', space=vmem, size = 0x9000, scoped, tag = 'internal scratch']
  #allocation2 [shape = 'f32[1,1]{1,0:T(1,128)S(1)}', space=vmem, size = 0x200, scoped, tag = 'scoped memory for net_forward.1']
  %s0 = inlined_call_operand.vmem [shape: f32[128,10], index: 0, kind: input, shape index: {}]
  %s1 = inlined_call_operand.vmem [shape: f32[32,10], index: 1, kind: input, shape index: {}]
  %s2 = inlined_call_operand.vmem [shape: f32[32,1], index: 2, kind: input, shape index: {}]
  %s3 = inlined_call_operand.vmem [shape: f32[16,32], index: 3, kind: input, shape index: {}]
  %s4 = inlined_call_operand.vmem [shape: f32[16,1], index: 4, kind: input, shape index: {}]
  %s5 = inlined_call_operand.vmem [shape: f32[16,1], index: 5, kind: input, shape index: {}]
  %s6 = inlined_call_operand.<no memory space> [shape: f32[1,1], index: 6, kind: input, shape index: {}]
  %s7 = inlined_call_operand.vmem [shape: f32[1,128], index: 7, kind: output, shape index: {}]
  %s8 = sld [smem:[#allocation0]]
  $region38: #{net_forward.1} parent=0
    _
  %s10 = ssub.s32 1, %s8
  %s11 = scalar_select 0, %s10, %s8
  %v12 = vstv %s6
  %13 = vst [vmem:[#allocation2] sm:$0x1] %v12
  // Predicated region
  $region2: #{net_forward.1} parent=0 // pred_check
    _
  $region3: #{net_forward.1} parent=0 // pred_check_branch
    %15 = sbr.rel (0) target = $region5
  $region4: #{net_forward.1} parent=0 // pred_region
    _
  $region5: #{net_forward.1} parent=0 // pred_fallthru
    _
  // Predicated region
  $region6: #{net_forward.1} parent=0 // pred_check
    _
  $region7: #{net_forward.1} parent=0 // pred_check_branch
    %17 = sbr.rel (0) target = $region9
  $region8: #{net_forward.1} parent=0 // pred_region
    _
  $region9: #{net_forward.1} parent=0 // pred_fallthru
    _
  // Predicated region
  $region10: #{net_forward.1} parent=0 // pred_check
    _
  $region11: #{net_forward.1} parent=0 // pred_check_branch
    %19 = sbr.rel (0) target = $region13
  $region12: #{net_forward.1} parent=0 // pred_region
    _
  $region13: #{net_forward.1} parent=0 // pred_fallthru
    _
  // Predicated region
  $region14: #{net_forward.1} parent=0 // pred_check
    _
  $region15: #{net_forward.1} parent=0 // pred_check_branch
    %21 = sbr.rel (0) target = $region17
  $region16: #{net_forward.1} parent=0 // pred_region
    _
  $region17: #{net_forward.1} parent=0 // pred_fallthru
    _
  // Predicated region
  $region18: #{net_forward.1} parent=0 // pred_check
    _
  $region19: #{net_forward.1} parent=0 // pred_check_branch
    %23 = sbr.rel (0) target = $region21
  $region20: #{net_forward.1} parent=0 // pred_region
    _
  $region21: #{net_forward.1} parent=0 // pred_fallthru
    _
  // Predicated region
  $region22: #{net_forward.1} parent=0 // pred_check
    _
  $region23: #{net_forward.1} parent=0 // pred_check_branch
    %25 = sbr.rel (0) target = $region25
  $region24: #{net_forward.1} parent=0 // pred_region
    _
  $region25: #{net_forward.1} parent=0 // pred_fallthru
    _
  // Predicated region
  $region26: #{net_forward.1} parent=0 // pred_check
    _
  $region27: #{net_forward.1} parent=0 // pred_check_branch
    %27 = sbr.rel (0) target = $region29
  $region28: #{net_forward.1} parent=0 // pred_region
    _
  $region29: #{net_forward.1} parent=0 // pred_fallthru
    _
  %v28 = vld [vmem:[%s0] sm:$0xff]
  %v29 = vld [vmem:[%s0 + $0x8] sm:$0xff]
  %v30 = vld [vmem:[%s0 + $0x10] sm:$0xff]
  %v31 = vld [vmem:[%s0 + $0x18] sm:$0xff]
  %v32 = vld [vmem:[%s0 + $0x20] sm:$0xff]
  %v33 = vld [vmem:[%s0 + $0x28] sm:$0xff]
  %v34 = vld [vmem:[%s0 + $0x30] sm:$0xff]
  %v35 = vld [vmem:[%s0 + $0x38] sm:$0xff]
  %v36 = vld [vmem:[%s0 + $0x40] sm:$0xff]
  %v37 = vld [vmem:[%s0 + $0x48] sm:$0xff]
  %v38 = vld [vmem:[%s0 + $0x50] sm:$0xff]
  %v39 = vld [vmem:[%s0 + $0x58] sm:$0xff]
  %v40 = vld [vmem:[%s0 + $0x60] sm:$0xff]
  %v41 = vld [vmem:[%s0 + $0x68] sm:$0xff]
  %v42 = vld [vmem:[%s0 + $0x70] sm:$0xff]
  %v43 = vld [vmem:[%s0 + $0x78] sm:$0xff]
  %v44 = vld [vmem:[%s1] sm:$0xff]
  %v45 = vld [vmem:[%s1 + $0x8] sm:$0xff]
  %v46 = vld [vmem:[%s1 + $0x10] sm:$0xff]
  %v47 = vld [vmem:[%s1 + $0x18] sm:$0xff]
  %v48 = vld [vmem:[%s2] sm:$0xff]
  %v49 = vld [vmem:[%s2 + $0x8] sm:$0xff]
  %v50 = vld [vmem:[%s2 + $0x10] sm:$0xff]
  %v51 = vld [vmem:[%s2 + $0x18] sm:$0xff]
  %53 = vset.pattern.permute.xlu0 0
  %54 = vperm.xlu0 %53, %v48
  %v55 = vpop.permute.xlu0 %54
  %58 = vset.pattern.permute.xlu0 0
  %59 = vperm.xlu0 %58, %v49
  %v60 = vpop.permute.xlu0 %59
  %63 = vset.pattern.permute.xlu0 0
  %64 = vperm.xlu0 %63, %v50
  %v65 = vpop.permute.xlu0 %64
  %68 = vset.pattern.permute.xlu0 0
  %69 = vperm.xlu0 %68, %v51
  %v70 = vpop.permute.xlu0 %69
  %vm72 = vcmask 80896
  %v74 = vsel %vm72, %v44, 0
  %v77 = vsel %vm72, %v45, 0
  %v80 = vsel %vm72, %v46, 0
  %v83 = vsel %vm72, %v47, 0
  %v86 = vsel %vm72, %v28, 0
  %v89 = vsel %vm72, %v29, 0
  %v92 = vsel %vm72, %v30, 0
  %v95 = vsel %vm72, %v31, 0
  %v98 = vsel %vm72, %v32, 0
  %v101 = vsel %vm72, %v33, 0
  %v104 = vsel %vm72, %v34, 0
  %v107 = vsel %vm72, %v35, 0
  %v110 = vsel %vm72, %v36, 0
  %v113 = vsel %vm72, %v37, 0
  %v116 = vsel %vm72, %v38, 0
  %v119 = vsel %vm72, %v39, 0
  %v122 = vsel %vm72, %v40, 0
  %v125 = vsel %vm72, %v41, 0
  %v128 = vsel %vm72, %v42, 0
  %v131 = vsel %vm72, %v43, 0
  %133 = vmatpush.xpose.msra.mxu0 %v131
  %134 = vmatpush.xpose.msra.mxu0 %v128
  %135 = vmatpush.xpose.msra.mxu0 %v125
  %136 = vmatpush.xpose.msra.mxu0 %v122
  %137 = vmatpush.xpose.msra.mxu0 %v119
  %138 = vmatpush.xpose.msra.mxu0 %v116
  %139 = vmatpush.xpose.msra.mxu0 %v113
  %140 = vmatpush.xpose.msra.mxu0 %v110
  %141 = vmatpush.xpose.msra.mxu0 %v107
  %142 = vmatpush.xpose.msra.mxu0 %v104
  %143 = vmatpush.xpose.msra.mxu0 %v101
  %144 = vmatpush.xpose.msra.mxu0 %v98
  %145 = vmatpush.xpose.msra.mxu0 %v95
  %146 = vmatpush.xpose.msra.mxu0 %v92
  %147 = vmatpush.xpose.msra.mxu0 %v89
  %148 = vmatpush.xpose.msra.mxu0 %v86
  %149 = vmatmul.f32.gmra.mxu0 %v74
  %v150 = vpop.f32.mrf.mxu0
  %v151 = vadd.f32 %v55, %v150
  %152 = vmatmul.f32.gmra.mxu0 %v77
  %v153 = vpop.f32.mrf.mxu0
  %v154 = vadd.f32 %v60, %v153
  %155 = vmatmul.f32.gmra.mxu0 %v80
  %v156 = vpop.f32.mrf.mxu0
  %v157 = vadd.f32 %v65, %v156
  %158 = vmatmul.f32.gmra.mxu0 %v83
  %v159 = vpop.f32.mrf.mxu0
  %v160 = vadd.f32 %v70, %v159
  %161 = vdwg.mxu0
  %v162 = vmax.f32 %v151, 0.0
  %v163 = vmax.f32 %v154, 0.0
  %v164 = vmax.f32 %v157, 0.0
  %v165 = vmax.f32 %v160, 0.0
  %v166 = vld [vmem:[%s3] sm:$0xff]
  %v167 = vld [vmem:[%s3 + $0x8] sm:$0xff]
  %v168 = vld [vmem:[%s4] sm:$0xff]
  %v169 = vld [vmem:[%s4 + $0x8] sm:$0xff]
  %171 = vset.pattern.permute.xlu0 0
  %172 = vperm.xlu0 %171, %v168
  %v173 = vpop.permute.xlu0 %172
  %176 = vset.pattern.permute.xlu0 0
  %177 = vperm.xlu0 %176, %v169
  %v178 = vpop.permute.xlu0 %177
  %vm180 = vcmask 261120
  %v182 = vsel %vm180, %v166, 0
  %v185 = vsel %vm180, %v167, 0
  %187 = vmatpush.msra.mxu0 0.0
  %188 = vmatpush.msra.mxu0 0.0
  %189 = vmatpush.msra.mxu0 0.0
  %190 = vmatpush.msra.mxu0 0.0
  %191 = vmatpush.msra.mxu0 0.0
  %192 = vmatpush.msra.mxu0 0.0
  %193 = vmatpush.msra.mxu0 0.0
  %194 = vmatpush.msra.mxu0 0.0
  %195 = vmatpush.msra.mxu0 0.0
  %196 = vmatpush.msra.mxu0 0.0
  %197 = vmatpush.msra.mxu0 0.0
  %198 = vmatpush.msra.mxu0 0.0
  %199 = vmatpush.msra.mxu0 %v165
  %200 = vmatpush.msra.mxu0 %v164
  %201 = vmatpush.msra.mxu0 %v163
  %202 = vmatpush.msra.mxu0 %v162
  %203 = vmatmul.f32.gmra.mxu0 %v182
  %v204 = vpop.f32.mrf.mxu0
  %v205 = vadd.f32 %v173, %v204
  %206 = vmatmul.f32.gmra.mxu0 %v185
  %v207 = vpop.f32.mrf.mxu0
  %v208 = vadd.f32 %v178, %v207
  %209 = vdwg.mxu0
  %v210 = vmax.f32 %v205, 0.0
  %v211 = vmax.f32 %v208, 0.0
  %v212 = vld [vmem:[%s5] sm:$0xff]
  %v213 = vld [vmem:[%s5 + $0x8] sm:$0xff]
  %215 = vset.pattern.permute.xlu0 0
  %216 = vperm.xlu0 %215, %v212
  %v217 = vpop.permute.xlu0 %216
  %220 = vset.pattern.permute.xlu0 0
  %221 = vperm.xlu0 %220, %v213
  %v222 = vpop.permute.xlu0 %221
  %v224 = vmul.f32 %v217, %v210
  %v225 = vmul.f32 %v222, %v211
  %v226 = vadd.f32 %v224, %v225
  %v227 = vrot.slane %v226, 4
  %v228 = vadd.f32 %v226, %v227
  %v229 = vrot.slane %v228, 2
  %v230 = vadd.f32 %v228, %v229
  %v231 = vrot.slane %v230, 1
  %v232 = vadd.f32 %v230, %v231
  %v233 = vld [vmem:[#allocation2] sm:$0x1]
  %235 = vset.pattern.permute.xlu0 0
  %236 = vperm.xlu0 %235, %v233
  %v237 = vpop.permute.xlu0 %236
  %v239 = vperm.slane %v237, 0
  %v240 = vadd.f32 %v232, %v239
  %241 = vst [vmem:[%s7] sm:$0x1] %v240
  // Predicated region
  $region30: #{net_forward.1} parent=0 // pred_check
    _
  $region31: #{net_forward.1} parent=0 // pred_check_branch
    %243 = sbr.rel (0) target = $region33
  $region32: #{net_forward.1} parent=0 // pred_region
    _
  $region33: #{net_forward.1} parent=0 // pred_fallthru
    _
  // Predicated region
  $region34: #{net_forward.1} parent=0 // pred_check
    _
  $region35: #{net_forward.1} parent=0 // pred_check_branch
    %245 = sbr.rel (0) target = $region37
  $region36: #{net_forward.1} parent=0 // pred_region
    _
  $region37: #{net_forward.1} parent=0 // pred_fallthru
    _

</llo_original>
